<compile_context>
chip_gen: v6e
topology: v6e:2x2x1
jax: 0.10.0
libtpu: 0.0.40
codegen_flags: <defaults>
</compile_context>

<pallas_src>
import math

import jax
import jax.numpy as jnp
from jax.experimental import pallas as pl
from jax.experimental.pallas import tpu as pltpu

FP = 128           # lane width of layers 2..4 (zero-padded; exact for the forward pass)
K1 = 16            # layer-1 contraction: 11 features + 4 zero lanes + 1 constant-one lane
BIAS_LANE = FP - 1 # activation lane that carries a constant 1.0 through every layer
N_LAYERS = 4


def _round_up(a, m):
    return ((a + m - 1) // m) * m


def deep_qnet_kernel(x_ref, w1_ref, wr_ref, o_ref):
    """Fused 4-layer MLP.  Biases are folded into the weights via the constant-one lane."""
    # Layer 1: (tile_b, 16) @ (16, 128) -> f32, ReLU (the constant-one lane stays 1.0).
    z = jnp.dot(x_ref[...], w1_ref[...], preferred_element_type=jnp.float32)
    h = jnp.maximum(z, 0.0).astype(wr_ref.dtype)
    # Layers 2..4: static Ref slices of the packed (384, 128) block — no full materialization.
    for k in range(N_LAYERS - 1):
        w = wr_ref[k * FP:(k + 1) * FP, :]            # (128, 128) slice straight from VMEM
        z = jnp.dot(h, w, preferred_element_type=jnp.float32)
        if k < N_LAYERS - 2:
            h = jnp.maximum(z, 0.0).astype(wr_ref.dtype)
        else:
            o_ref[...] = z.astype(o_ref.dtype)        # lane-dense 128-wide bf16 store


def pack_params(params, param_dtype):
    """Pack [(W [in,out], b [out])] * 4 into (K1,128) + (384,128) blocks with folded biases."""
    # Layer 1 block: rows 0..10 = W1, row 15 = [b1 | ... | 1.0 at lane 127].
    w1, b1 = params[0]
    din1, dout1 = w1.shape
    p1 = jnp.zeros((K1, FP), jnp.float32)
    p1 = p1.at[:din1, :dout1].set(w1)
    p1 = p1.at[K1 - 1, :dout1].set(b1.reshape(-1))
    p1 = p1.at[K1 - 1, BIAS_LANE].set(1.0)            # propagate the constant-one lane

    # Layers 2..4: each 128-row block has W in rows 0..din-1 and the bias in row 127.
    pr = jnp.zeros(((N_LAYERS - 1) * FP, FP), jnp.float32)
    for k, (w, b) in enumerate(params[1:]):
        din, dout = w.shape
        pr = pr.at[k * FP:k * FP + din, :dout].set(w)
        pr = pr.at[k * FP + BIAS_LANE, :dout].set(b.reshape(-1))
        if k < N_LAYERS - 2:                          # keep the 1.0 alive through layers 2,3
            pr = pr.at[k * FP + BIAS_LANE, BIAS_LANE].set(1.0)
    return p1.astype(param_dtype), pr.astype(param_dtype)


def _choose_tiling(batch, tile_b):
    """Batch tile: big & few steps; grid=(1,) for small batches; balanced >=2 steps otherwise."""
    b16 = _round_up(max(batch, 1), 16)
    tile_b = max(16, min(_round_up(tile_b, 16), 2048))   # 2048 cap keeps v5e scoped VMEM safe
    if b16 <= tile_b:
        return b16, b16                                   # single grid step (v5e/v6e friendly)
    n_steps = -(-b16 // tile_b)
    tile_b = _round_up(-(-b16 // n_steps), 16)            # rebalance into equal tiles (v7x 2-TC)
    return tile_b, n_steps * tile_b


def deep_qnet_forward(x, params, *, tile_b=1024, param_dtype=jnp.bfloat16):
    """x: [B, 11] float32; params: list of (W_t [in, out], b [out]) for 4 layers."""
    B, in_dim = x.shape
    out_dim = params[-1][0].shape[1]

    p1, pr = pack_params(params, param_dtype)
    tile_b, b_pad = _choose_tiling(B, tile_b)

    # Narrow 16-lane input: features + zero lanes + constant-one bias lane. Exact padding.
    x_p = jnp.zeros((b_pad, K1), param_dtype)
    x_p = x_p.at[:B, :in_dim].set(x.astype(param_dtype))
    x_p = x_p.at[:, K1 - 1].set(jnp.asarray(1.0, param_dtype))

    grid = (b_pad // tile_b,)

    # True useful work (not padded work) so XLA's scheduler isn't misled.
    true_flops = 2 * B * sum(w.shape[0] * w.shape[1] for w, _ in params)
    cost = pl.CostEstimate(
        flops=int(true_flops),
        transcendentals=0,
        bytes_accessed=int(x_p.size * x_p.dtype.itemsize
                           + p1.size * p1.dtype.itemsize
                           + pr.size * pr.dtype.itemsize
                           + b_pad * FP * jnp.dtype(param_dtype).itemsize),
    )

    out_padded = pl.pallas_call(
        deep_qnet_kernel,
        out_shape=jax.ShapeDtypeStruct((b_pad, FP), param_dtype),
        grid=grid,
        in_specs=[
            pl.BlockSpec((tile_b, K1), lambda i: (i, 0)),              # batch-tiled activations
            pl.BlockSpec((K1, FP), lambda i: (0, 0)),                  # layer-1 weights, resident
            pl.BlockSpec(((N_LAYERS - 1) * FP, FP), lambda i: (0, 0)), # layers 2-4, resident
        ],
        out_specs=pl.BlockSpec((tile_b, FP), lambda i: (i, 0)),
        compiler_params=pltpu.CompilerParams(
            dimension_semantics=("parallel",),        # megacore / v7x 2-TC split over batch
        ),
        cost_estimate=cost,
    )(x_p, p1, pr)

    return out_padded[:B, :out_dim].astype(jnp.float32)


def init_linear_params(key, in_features, out_features):
    # Mirror torch.nn.Linear default init: U(-1/sqrt(fan_in), 1/sqrt(fan_in)).
    kw, kb = jax.random.split(key)
    bound = 1.0 / math.sqrt(in_features)
    # Stored pre-transposed: [in_features, out_features].
    w_t = jax.random.uniform(kw, (in_features, out_features), jnp.float32,
                             minval=-bound, maxval=bound)
    b = jax.random.uniform(kb, (out_features,), jnp.float32,
                           minval=-bound, maxval=bound)
    return w_t, b


if __name__ == "__main__":
    # options.layers = [32, 64, 32]
    layer_one, layer_two, layer_three = 32, 64, 32
    batch, in_dim, out_dim = 64, 11, 3

    key = jax.random.PRNGKey(0)
    k_x, k1, k2, k3, k4 = jax.random.split(key, 5)

    x = jax.random.normal(k_x, (batch, in_dim), jnp.float32)

    params = [
        init_linear_params(k1, in_dim, layer_one),
        init_linear_params(k2, layer_one, layer_two),
        init_linear_params(k3, layer_two, layer_three),
        init_linear_params(k4, layer_three, out_dim),
    ]

    # Default path: small batch -> grid=(1,), no per-step overhead (v5e/v6e guidance).
    out = jax.block_until_ready(deep_qnet_forward(x, params))
    # Also exercise the multi-step batch-tiled path that large batches / v7x use.
    out_tiled = jax.block_until_ready(deep_qnet_forward(x, params, tile_b=32))

    # Pure-JAX reference mirroring the kernel's bf16 param/activation quantization.
    def q(a):
        return a.astype(jnp.bfloat16).astype(jnp.float32)

    ref = q(x)
    for i, (w, b) in enumerate(params):
        ref = ref @ q(w) + q(b)
        if i < 3:
            ref = q(jnp.maximum(ref, 0.0))
    ref = q(ref)

    assert out.shape == (batch, out_dim)
    assert out_tiled.shape == (batch, out_dim)
    assert jnp.allclose(out, ref, atol=5e-2, rtol=5e-2), \
        float(jnp.max(jnp.abs(out - ref)))
    assert jnp.allclose(out_tiled, ref, atol=5e-2, rtol=5e-2), \
        float(jnp.max(jnp.abs(out_tiled - ref)))

    print("KERNEL_OK")
</pallas_src>

<mosaic_0001>
module attributes {stable_mosaic.version = 11 : i64} {
  func.func @deep_qnet_kernel(%arg0: i32, %arg1: memref<64x16xbf16, #tpu.memory_space<vmem>>, %arg2: memref<16x128xbf16, #tpu.memory_space<vmem>>, %arg3: memref<384x128xbf16, #tpu.memory_space<vmem>>, %arg4: memref<64x128xbf16, #tpu.memory_space<vmem>>) attributes {dimension_semantics = [#tpu.dimension_semantics<parallel>], iteration_bounds = array<i64: 1>, scalar_prefetch = 0 : i64, scratch_operands = 0 : i64, tpu.core_type = #tpu.core_type<tc>, window_params = [{transform_indices = @transform_0, window_bounds = array<i64: 64, 16>}, {pipeline_mode = #tpu.pipeline_mode<synchronous>, transform_indices = @transform_1, window_bounds = array<i64: 16, 128>}, {pipeline_mode = #tpu.pipeline_mode<synchronous>, transform_indices = @transform_2, window_bounds = array<i64: 384, 128>}, {transform_indices = @transform_3, window_bounds = array<i64: 64, 128>}]} {
    %c0 = arith.constant 0 : index
    %c0_0 = arith.constant 0 : index
    %0 = vector.load %arg1[%c0, %c0_0] : memref<64x16xbf16, #tpu.memory_space<vmem>>, vector<64x16xbf16>
    %c0_1 = arith.constant 0 : index
    %c0_2 = arith.constant 0 : index
    %1 = vector.load %arg2[%c0_1, %c0_2] : memref<16x128xbf16, #tpu.memory_space<vmem>>, vector<16x128xbf16>
    %cst = arith.constant dense<0.000000e+00> : vector<64x128xf32>
    %2 = tpu.matmul %0, %1, %cst {dimension_numbers = #tpu.dot_dimension_numbers<[1], [0], [0], [1], [0, 0, 1, 1], [], []>} : vector<64x16xbf16>, vector<16x128xbf16>, vector<64x128xf32> -> vector<64x128xf32>
    %cst_3 = arith.constant 0.000000e+00 : f32
    %3 = vector.broadcast %cst_3 : f32 to vector<64x128xf32>
    %4 = arith.maximumf %2, %3 : vector<64x128xf32>
    %5 = arith.truncf %4 : vector<64x128xf32> to vector<64x128xbf16>
    %c0_4 = arith.constant 0 : index
    %c0_5 = arith.constant 0 : index
    %6 = vector.load %arg3[%c0_4, %c0_5] : memref<384x128xbf16, #tpu.memory_space<vmem>>, vector<128x128xbf16>
    %cst_6 = arith.constant dense<0.000000e+00> : vector<64x128xf32>
    %7 = tpu.matmul %5, %6, %cst_6 {dimension_numbers = #tpu.dot_dimension_numbers<[1], [0], [0], [1], [0, 0, 1, 1], [], []>} : vector<64x128xbf16>, vector<128x128xbf16>, vector<64x128xf32> -> vector<64x128xf32>
    %cst_7 = arith.constant 0.000000e+00 : f32
    %8 = vector.broadcast %cst_7 : f32 to vector<64x128xf32>
    %9 = arith.maximumf %7, %8 : vector<64x128xf32>
    %10 = arith.truncf %9 : vector<64x128xf32> to vector<64x128xbf16>
    %c128 = arith.constant 128 : index
    %c0_8 = arith.constant 0 : index
    %11 = vector.load %arg3[%c128, %c0_8] : memref<384x128xbf16, #tpu.memory_space<vmem>>, vector<128x128xbf16>
    %cst_9 = arith.constant dense<0.000000e+00> : vector<64x128xf32>
    %12 = tpu.matmul %10, %11, %cst_9 {dimension_numbers = #tpu.dot_dimension_numbers<[1], [0], [0], [1], [0, 0, 1, 1], [], []>} : vector<64x128xbf16>, vector<128x128xbf16>, vector<64x128xf32> -> vector<64x128xf32>
    %cst_10 = arith.constant 0.000000e+00 : f32
    %13 = vector.broadcast %cst_10 : f32 to vector<64x128xf32>
    %14 = arith.maximumf %12, %13 : vector<64x128xf32>
    %15 = arith.truncf %14 : vector<64x128xf32> to vector<64x128xbf16>
    %c256 = arith.constant 256 : index
    %c0_11 = arith.constant 0 : index
    %16 = vector.load %arg3[%c256, %c0_11] : memref<384x128xbf16, #tpu.memory_space<vmem>>, vector<128x128xbf16>
    %cst_12 = arith.constant dense<0.000000e+00> : vector<64x128xf32>
    %17 = tpu.matmul %15, %16, %cst_12 {dimension_numbers = #tpu.dot_dimension_numbers<[1], [0], [0], [1], [0, 0, 1, 1], [], []>} : vector<64x128xbf16>, vector<128x128xbf16>, vector<64x128xf32> -> vector<64x128xf32>
    %18 = arith.truncf %17 : vector<64x128xf32> to vector<64x128xbf16>
    %c0_13 = arith.constant 0 : index
    %c0_14 = arith.constant 0 : index
    %19 = vector.load %arg4[%c0_13, %c0_14] : memref<64x128xbf16, #tpu.memory_space<vmem>>, vector<64x128xbf16>
    tpu.vector_store %arg4[%c0_13, %c0_14], %18 {strides = array<i32>} : memref<64x128xbf16, #tpu.memory_space<vmem>>, vector<64x128xbf16>,
    return
  }
  func.func @transform_0(%arg0: i32) -> (i32, i32) {
    %c0_i32 = arith.constant 0 : i32
    %c0_i32_0 = arith.constant 0 : i32
    return %arg0, %c0_i32 : i32, i32
  }
  func.func @transform_1(%arg0: i32) -> (i32, i32) {
    %c0_i32 = arith.constant 0 : i32
    %c0_i32_0 = arith.constant 0 : i32
    %c0_i32_1 = arith.constant 0 : i32
    return %c0_i32, %c0_i32_0 : i32, i32
  }
  func.func @transform_2(%arg0: i32) -> (i32, i32) {
    %c0_i32 = arith.constant 0 : i32
    %c0_i32_0 = arith.constant 0 : i32
    %c0_i32_1 = arith.constant 0 : i32
    return %c0_i32, %c0_i32_0 : i32, i32
  }
  func.func @transform_3(%arg0: i32) -> (i32, i32) {
    %c0_i32 = arith.constant 0 : i32
    %c0_i32_0 = arith.constant 0 : i32
    return %arg0, %c0_i32 : i32, i32
  }
}

</mosaic_0001>

<llo_original>
// kernel: tpu_custom_call.1
$region0: #{tpu_custom_call.1}
  #allocation0 [shape = 'u32[]', space=smem, size = 0x4, offset = 0x4, fixed_abs, tag = 'smem constant byte address 0x4 - core index']
  #allocation1 [shape = 'u32[144,128]{1,0:T(1,128)}', space=vmem, size = 0x12000, scoped, tag = 'internal scratch']
  %s0 = inlined_call_operand.vmem [shape: bf16[64,16], index: 0, kind: input, shape index: {}]
  %s1 = inlined_call_operand.vmem [shape: bf16[16,128], index: 1, kind: input, shape index: {}]
  %s2 = inlined_call_operand.hbm [shape: bf16[384,128], index: 2, kind: input, shape index: {}]
  %s3 = inlined_call_operand.hbm [shape: bf16[64,128], index: 3, kind: output, shape index: {}]
  %s4 = sld [smem:[#allocation0]]
  $region26: #{tpu_custom_call.1} parent=0
    _
  %s6 = ssub.s32 1, %s4
  %s7 = scalar_select 0, %s6, %s4
  $region1: #{tpu_custom_call.1} parent=0
    #allocation2 [shape = 'u8[98304]{0}', space=vmem, size = 0x18000, scoped, tag = 'input window, operand 2, single buffered']
    #allocation3 [shape = 's32[1]{0}', space=sflag, size = 0x4, scoped, tag = 'scoped memory for tpu_custom_call.1']
    #allocation4 [shape = 's32[1]{0}', space=sflag, size = 0x4, scoped, tag = 'scoped memory for tpu_custom_call.1']
    #allocation5 [shape = 'u8[16384]{0}', space=vmem, size = 0x4000, scoped, tag = 'output window, operand 0, single buffered']
    %8 = vsyncpa [#allocation3], 0
    %9 = vsyncpa [#allocation4], 0
    // Predicated region
    $region2: #{tpu_custom_call.1} parent=1 // pred_check
      _
    $region3: #{tpu_custom_call.1} parent=1 // pred_check_branch
      %11 = sbr.rel (0) target = $region5
    $region4: #{tpu_custom_call.1} parent=1 // pred_region
      _
    $region5: #{tpu_custom_call.1} parent=1 // pred_fallthru
      _
    // Predicated region
    $region6: #{tpu_custom_call.1} parent=1 // pred_check
      _
    $region7: #{tpu_custom_call.1} parent=1 // pred_check_branch
      %13 = sbr.rel (0) target = $region9
    $region8: #{tpu_custom_call.1} parent=1 // pred_region
      _
    $region9: #{tpu_custom_call.1} parent=1 // pred_fallthru
      _
    // Predicated region
    $region10: #{tpu_custom_call.1} parent=1 // pred_check
      _
    $region11: #{tpu_custom_call.1} parent=1 // pred_check_branch
      %15 = sbr.rel (0) target = $region13
    $region12: #{tpu_custom_call.1} parent=1 // pred_region
      %s17 = ssub.s32 3072, 3072
      %18 = vsyncadd [#allocation3], %s17
      %s19 = sshll.u32 [#allocation2], 4
      %s20 = int_to_ptr.vmem [resolvable:$true] %s19
      %25 = dma.hbm_to_vmem [thread:$0]  %s2, 3072, %s20, [#allocation3], 64, 64, 4
    $region13: #{tpu_custom_call.1} parent=1 // pred_fallthru
      _
    // Predicated region
    $region14: #{tpu_custom_call.1} parent=1 // pred_check
      _
    $region15: #{tpu_custom_call.1} parent=1 // pred_check_branch
      %27 = sbr.rel (0) target = $region17
    $region16: #{tpu_custom_call.1} parent=1 // pred_region
      %28 = dma.done [#allocation3], 3072
    $region17: #{tpu_custom_call.1} parent=1 // pred_fallthru
      _
    %v30 = vld [vmem:[%s0] sm:$0xf]
    %v31 = vld [vmem:[%s0 + $0x4] sm:$0xf]
    %v32 = vld [vmem:[%s0 + $0x8] sm:$0xf]
    %v33 = vld [vmem:[%s0 + $0xc] sm:$0xf]
    %v34 = vld [vmem:[%s0 + $0x10] sm:$0xf]
    %v35 = vld [vmem:[%s0 + $0x14] sm:$0xf]
    %v36 = vld [vmem:[%s0 + $0x18] sm:$0xf]
    %v37 = vld [vmem:[%s0 + $0x1c] sm:$0xf]
    %v38 = vld [vmem:[%s1] sm:$0xf]
    %v39 = vld [vmem:[%s1 + $0x4] sm:$0xf]
    %v48 = vunpack.c.l.b16 %v30
    %v49 = vunpack.c.l.b16 %v31
    %v50 = vunpack.c.l.b16 %v32
    %v51 = vunpack.c.l.b16 %v33
    %v52 = vunpack.c.l.b16 %v34
    %v53 = vunpack.c.l.b16 %v35
    %v54 = vunpack.c.l.b16 %v36
    %v55 = vunpack.c.l.b16 %v37
    %v56 = vpack.c.b16 %v49, %v48
    %v57 = vpack.c.b16 %v51, %v50
    %v58 = vpack.c.b16 %v53, %v52
    %v59 = vpack.c.b16 %v55, %v54
    %v62 = vunpack.c.l.b16 %v38
    %v63 = vunpack.c.l.b16 %v39
    %v64 = vpack.c.b16 %v63, %v62
    %vm66 = vcmask 130048
    %v68 = vsel %vm66, %v56, 0
    %v71 = vsel %vm66, %v57, 0
    %v74 = vsel %vm66, %v58, 0
    %v77 = vsel %vm66, %v59, 0
    %79 = vmatprep.subr.bf16.mxu0 0
    %80 = vmatpush1.bf16.msra.mxu0 0
    %81 = vmatprep.subr.bf16.mxu0 0
    %82 = vmatpush1.bf16.msra.mxu0 0
    %83 = vmatprep.subr.bf16.mxu0 0
    %84 = vmatpush1.bf16.msra.mxu0 0
    %85 = vmatprep.subr.bf16.mxu0 0
    %86 = vmatpush1.bf16.msra.mxu0 0
    %87 = vmatprep.subr.bf16.mxu0 0
    %88 = vmatpush1.bf16.msra.mxu0 0
    %89 = vmatprep.subr.bf16.mxu0 0
    %90 = vmatpush1.bf16.msra.mxu0 0
    %91 = vmatprep.subr.bf16.mxu0 0
    %92 = vmatpush1.bf16.msra.mxu0 0
    %93 = vmatprep.subr.bf16.mxu0 0
    %94 = vmatpush1.bf16.msra.mxu0 %v64
    %95 = vmatprep.subr.bf16.mxu0 0
    %96 = vmatpush2.bf16.msra.mxu0 0
    %97 = vmatprep.subr.bf16.mxu0 0
    %98 = vmatpush2.bf16.msra.mxu0 0
    %99 = vmatprep.subr.bf16.mxu0 0
    %100 = vmatpush2.bf16.msra.mxu0 0
    %101 = vmatprep.subr.bf16.mxu0 0
    %102 = vmatpush2.bf16.msra.mxu0 0
    %103 = vmatprep.subr.bf16.mxu0 0
    %104 = vmatpush2.bf16.msra.mxu0 0
    %105 = vmatprep.subr.bf16.mxu0 0
    %106 = vmatpush2.bf16.msra.mxu0 0
    %107 = vmatprep.subr.bf16.mxu0 0
    %108 = vmatpush2.bf16.msra.mxu0 0
    %109 = vmatprep.subr.bf16.mxu0 0
    %110 = vmatpush2.bf16.msra.mxu0 0
    %111 = vmatprep.mubr.bf16.mxu0 0
    %112 = vmatmul.mubr.bf16.gmra.mxu0 %v68
    %v113 = vpop.f32.mrf.mxu0
    %v114 = vadd.f32 0.0, %v113
    %v115 = vpop.f32.mrf.mxu0
    %v116 = vpop.f32.mrf.mxu0
    %v117 = vadd.f32 0.0, %v116
    %v118 = vpop.f32.mrf.mxu0
    %119 = vmatprep.mubr.bf16.mxu0 0
    %120 = vmatmul.mubr.bf16.gmra.mxu0 %v71
    %v121 = vpop.f32.mrf.mxu0
    %v122 = vadd.f32 0.0, %v121
    %v123 = vpop.f32.mrf.mxu0
    %v124 = vpop.f32.mrf.mxu0
    %v125 = vadd.f32 0.0, %v124
    %v126 = vpop.f32.mrf.mxu0
    %127 = vmatprep.mubr.bf16.mxu0 0
    %128 = vmatmul.mubr.bf16.gmra.mxu0 %v74
    %v129 = vpop.f32.mrf.mxu0
    %v130 = vadd.f32 0.0, %v129
    %v131 = vpop.f32.mrf.mxu0
    %v132 = vpop.f32.mrf.mxu0
    %v133 = vadd.f32 0.0, %v132
    %v134 = vpop.f32.mrf.mxu0
    %135 = vmatprep.mubr.bf16.mxu0 0
    %136 = vmatmul.mubr.bf16.gmra.mxu0 %v77
    %v137 = vpop.f32.mrf.mxu0
    %v138 = vadd.f32 0.0, %v137
    %v139 = vpop.f32.mrf.mxu0
    %v140 = vpop.f32.mrf.mxu0
    %v141 = vadd.f32 0.0, %v140
    %v142 = vpop.f32.mrf.mxu0
    %143 = vdwg.mxu0
    %v144 = vmax.f32 %v114, 0.0
    %v145 = vmax.f32 %v117, 0.0
    %v146 = vmax.f32 %v122, 0.0
    %v147 = vmax.f32 %v125, 0.0
    %v148 = vmax.f32 %v130, 0.0
    %v149 = vmax.f32 %v133, 0.0
    %v150 = vmax.f32 %v138, 0.0
    %v151 = vmax.f32 %v141, 0.0
    %v152 = vpack.c.bf16 %v145, %v144
    %v153 = vpack.c.bf16 %v147, %v146
    %v154 = vpack.c.bf16 %v149, %v148
    %v155 = vpack.c.bf16 %v151, %v150
    %v156 = vld [vmem:[#allocation2] sm:$0xf]
    %v157 = vld [vmem:[#allocation2 + $0x4] sm:$0xf]
    %v158 = vld [vmem:[#allocation2 + $0x8] sm:$0xf]
    %v159 = vld [vmem:[#allocation2 + $0xc] sm:$0xf]
    %v160 = vld [vmem:[#allocation2 + $0x10] sm:$0xf]
    %v161 = vld [vmem:[#allocation2 + $0x14] sm:$0xf]
    %v162 = vld [vmem:[#allocation2 + $0x18] sm:$0xf]
    %v163 = vld [vmem:[#allocation2 + $0x1c] sm:$0xf]
    %v164 = vld [vmem:[#allocation2 + $0x20] sm:$0xf]
    %v165 = vld [vmem:[#allocation2 + $0x24] sm:$0xf]
    %v166 = vld [vmem:[#allocation2 + $0x28] sm:$0xf]
    %v167 = vld [vmem:[#allocation2 + $0x2c] sm:$0xf]
    %v168 = vld [vmem:[#allocation2 + $0x30] sm:$0xf]
    %v169 = vld [vmem:[#allocation2 + $0x34] sm:$0xf]
    %v170 = vld [vmem:[#allocation2 + $0x38] sm:$0xf]
    %v171 = vld [vmem:[#allocation2 + $0x3c] sm:$0xf]
    %v188 = vunpack.c.l.b16 %v156
    %v189 = vunpack.c.l.b16 %v157
    %v190 = vunpack.c.l.b16 %v158
    %v191 = vunpack.c.l.b16 %v159
    %v192 = vunpack.c.l.b16 %v160
    %v193 = vunpack.c.l.b16 %v161
    %v194 = vunpack.c.l.b16 %v162
    %v195 = vunpack.c.l.b16 %v163
    %v196 = vunpack.c.l.b16 %v164
    %v197 = vunpack.c.l.b16 %v165
    %v198 = vunpack.c.l.b16 %v166
    %v199 = vunpack.c.l.b16 %v167
    %v200 = vunpack.c.l.b16 %v168
    %v201 = vunpack.c.l.b16 %v169
    %v202 = vunpack.c.l.b16 %v170
    %v203 = vunpack.c.l.b16 %v171
    %v204 = vpack.c.b16 %v189, %v188
    %v205 = vpack.c.b16 %v191, %v190
    %v206 = vpack.c.b16 %v193, %v192
    %v207 = vpack.c.b16 %v195, %v194
    %v208 = vpack.c.b16 %v197, %v196
    %v209 = vpack.c.b16 %v199, %v198
    %v210 = vpack.c.b16 %v201, %v200
    %v211 = vpack.c.b16 %v203, %v202
    %220 = vmatprep.subr.bf16.mxu0 0
    %221 = vmatpush1.bf16.msra.mxu0 %v211
    %222 = vmatprep.subr.bf16.mxu0 0
    %223 = vmatpush1.bf16.msra.mxu0 %v210
    %224 = vmatprep.subr.bf16.mxu0 0
    %225 = vmatpush1.bf16.msra.mxu0 %v209
    %226 = vmatprep.subr.bf16.mxu0 0
    %227 = vmatpush1.bf16.msra.mxu0 %v208
    %228 = vmatprep.subr.bf16.mxu0 0
    %229 = vmatpush1.bf16.msra.mxu0 %v207
    %230 = vmatprep.subr.bf16.mxu0 0
    %231 = vmatpush1.bf16.msra.mxu0 %v206
    %232 = vmatprep.subr.bf16.mxu0 0
    %233 = vmatpush1.bf16.msra.mxu0 %v205
    %234 = vmatprep.subr.bf16.mxu0 0
    %235 = vmatpush1.bf16.msra.mxu0 %v204
    %236 = vmatprep.subr.bf16.mxu0 0
    %237 = vmatpush2.bf16.msra.mxu0 0
    %238 = vmatprep.subr.bf16.mxu0 0
    %239 = vmatpush2.bf16.msra.mxu0 0
    %240 = vmatprep.subr.bf16.mxu0 0
    %241 = vmatpush2.bf16.msra.mxu0 0
    %242 = vmatprep.subr.bf16.mxu0 0
    %243 = vmatpush2.bf16.msra.mxu0 0
    %244 = vmatprep.subr.bf16.mxu0 0
    %245 = vmatpush2.bf16.msra.mxu0 0
    %246 = vmatprep.subr.bf16.mxu0 0
    %247 = vmatpush2.bf16.msra.mxu0 0
    %248 = vmatprep.subr.bf16.mxu0 0
    %249 = vmatpush2.bf16.msra.mxu0 0
    %250 = vmatprep.subr.bf16.mxu0 0
    %251 = vmatpush2.bf16.msra.mxu0 0
    %252 = vmatprep.mubr.bf16.mxu0 0
    %253 = vmatmul.mubr.bf16.gmra.mxu0 %v152
    %v254 = vpop.f32.mrf.mxu0
    %v255 = vadd.f32 0.0, %v254
    %v256 = vpop.f32.mrf.mxu0
    %v257 = vpop.f32.mrf.mxu0
    %v258 = vadd.f32 0.0, %v257
    %v259 = vpop.f32.mrf.mxu0
    %260 = vmatprep.mubr.bf16.mxu0 0
    %261 = vmatmul.mubr.bf16.gmra.mxu0 %v153
    %v262 = vpop.f32.mrf.mxu0
    %v263 = vadd.f32 0.0, %v262
    %v264 = vpop.f32.mrf.mxu0
    %v265 = vpop.f32.mrf.mxu0
    %v266 = vadd.f32 0.0, %v265
    %v267 = vpop.f32.mrf.mxu0
    %268 = vmatprep.mubr.bf16.mxu0 0
    %269 = vmatmul.mubr.bf16.gmra.mxu0 %v154
    %v270 = vpop.f32.mrf.mxu0
    %v271 = vadd.f32 0.0, %v270
    %v272 = vpop.f32.mrf.mxu0
    %v273 = vpop.f32.mrf.mxu0
    %v274 = vadd.f32 0.0, %v273
    %v275 = vpop.f32.mrf.mxu0
    %276 = vmatprep.mubr.bf16.mxu0 0
    %277 = vmatmul.mubr.bf16.gmra.mxu0 %v155
    %v278 = vpop.f32.mrf.mxu0
    %v279 = vadd.f32 0.0, %v278
    %v280 = vpop.f32.mrf.mxu0
    %v281 = vpop.f32.mrf.mxu0
    %v282 = vadd.f32 0.0, %v281
    %v283 = vpop.f32.mrf.mxu0
    %284 = vdwg.mxu0
    %v285 = vmax.f32 %v255, 0.0
    %v286 = vmax.f32 %v258, 0.0
    %v287 = vmax.f32 %v263, 0.0
    %v288 = vmax.f32 %v266, 0.0
    %v289 = vmax.f32 %v271, 0.0
    %v290 = vmax.f32 %v274, 0.0
    %v291 = vmax.f32 %v279, 0.0
    %v292 = vmax.f32 %v282, 0.0
    %v293 = vpack.c.bf16 %v286, %v285
    %v294 = vpack.c.bf16 %v288, %v287
    %v295 = vpack.c.bf16 %v290, %v289
    %v296 = vpack.c.bf16 %v292, %v291
    %v297 = vld [vmem:[#allocation2 + $0x40] sm:$0xf]
    %v298 = vld [vmem:[#allocation2 + $0x44] sm:$0xf]
    %v299 = vld [vmem:[#allocation2 + $0x48] sm:$0xf]
    %v300 = vld [vmem:[#allocation2 + $0x4c] sm:$0xf]
    %v301 = vld [vmem:[#allocation2 + $0x50] sm:$0xf]
    %v302 = vld [vmem:[#allocation2 + $0x54] sm:$0xf]
    %v303 = vld [vmem:[#allocation2 + $0x58] sm:$0xf]
    %v304 = vld [vmem:[#allocation2 + $0x5c] sm:$0xf]
    %v305 = vld [vmem:[#allocation2 + $0x60] sm:$0xf]
    %v306 = vld [vmem:[#allocation2 + $0x64] sm:$0xf]
    %v307 = vld [vmem:[#allocation2 + $0x68] sm:$0xf]
    %v308 = vld [vmem:[#allocation2 + $0x6c] sm:$0xf]
    %v309 = vld [vmem:[#allocation2 + $0x70] sm:$0xf]
    %v310 = vld [vmem:[#allocation2 + $0x74] sm:$0xf]
    %v311 = vld [vmem:[#allocation2 + $0x78] sm:$0xf]
    %v312 = vld [vmem:[#allocation2 + $0x7c] sm:$0xf]
    %v329 = vunpack.c.l.b16 %v297
    %v330 = vunpack.c.l.b16 %v298
    %v331 = vunpack.c.l.b16 %v299
    %v332 = vunpack.c.l.b16 %v300
    %v333 = vunpack.c.l.b16 %v301
    %v334 = vunpack.c.l.b16 %v302
    %v335 = vunpack.c.l.b16 %v303
    %v336 = vunpack.c.l.b16 %v304
    %v337 = vunpack.c.l.b16 %v305
    %v338 = vunpack.c.l.b16 %v306
    %v339 = vunpack.c.l.b16 %v307
    %v340 = vunpack.c.l.b16 %v308
    %v341 = vunpack.c.l.b16 %v309
    %v342 = vunpack.c.l.b16 %v310
    %v343 = vunpack.c.l.b16 %v311
    %v344 = vunpack.c.l.b16 %v312
    %v345 = vpack.c.b16 %v330, %v329
    %v346 = vpack.c.b16 %v332, %v331
    %v347 = vpack.c.b16 %v334, %v333
    %v348 = vpack.c.b16 %v336, %v335
    %v349 = vpack.c.b16 %v338, %v337
    %v350 = vpack.c.b16 %v340, %v339
    %v351 = vpack.c.b16 %v342, %v341
    %v352 = vpack.c.b16 %v344, %v343
    %361 = vmatprep.subr.bf16.mxu0 0
    %362 = vmatpush1.bf16.msra.mxu0 %v352
    %363 = vmatprep.subr.bf16.mxu0 0
    %364 = vmatpush1.bf16.msra.mxu0 %v351
    %365 = vmatprep.subr.bf16.mxu0 0
    %366 = vmatpush1.bf16.msra.mxu0 %v350
    %367 = vmatprep.subr.bf16.mxu0 0
    %368 = vmatpush1.bf16.msra.mxu0 %v349
    %369 = vmatprep.subr.bf16.mxu0 0
    %370 = vmatpush1.bf16.msra.mxu0 %v348
    %371 = vmatprep.subr.bf16.mxu0 0
    %372 = vmatpush1.bf16.msra.mxu0 %v347
    %373 = vmatprep.subr.bf16.mxu0 0
    %374 = vmatpush1.bf16.msra.mxu0 %v346
    %375 = vmatprep.subr.bf16.mxu0 0
    %376 = vmatpush1.bf16.msra.mxu0 %v345
    %377 = vmatprep.subr.bf16.mxu0 0
    %378 = vmatpush2.bf16.msra.mxu0 0
    %379 = vmatprep.subr.bf16.mxu0 0
    %380 = vmatpush2.bf16.msra.mxu0 0
    %381 = vmatprep.subr.bf16.mxu0 0
    %382 = vmatpush2.bf16.msra.mxu0 0
    %383 = vmatprep.subr.bf16.mxu0 0
    %384 = vmatpush2.bf16.msra.mxu0 0
    %385 = vmatprep.subr.bf16.mxu0 0
    %386 = vmatpush2.bf16.msra.mxu0 0
    %387 = vmatprep.subr.bf16.mxu0 0
    %388 = vmatpush2.bf16.msra.mxu0 0
    %389 = vmatprep.subr.bf16.mxu0 0
    %390 = vmatpush2.bf16.msra.mxu0 0
    %391 = vmatprep.subr.bf16.mxu0 0
    %392 = vmatpush2.bf16.msra.mxu0 0
    %393 = vmatprep.mubr.bf16.mxu0 0
    %394 = vmatmul.mubr.bf16.gmra.mxu0 %v293
    %v395 = vpop.f32.mrf.mxu0
    %v396 = vadd.f32 0.0, %v395
    %v397 = vpop.f32.mrf.mxu0
    %v398 = vpop.f32.mrf.mxu0
    %v399 = vadd.f32 0.0, %v398
    %v400 = vpop.f32.mrf.mxu0
    %401 = vmatprep.mubr.bf16.mxu0 0
    %402 = vmatmul.mubr.bf16.gmra.mxu0 %v294
    %v403 = vpop.f32.mrf.mxu0
    %v404 = vadd.f32 0.0, %v403
    %v405 = vpop.f32.mrf.mxu0
    %v406 = vpop.f32.mrf.mxu0
    %v407 = vadd.f32 0.0, %v406
    %v408 = vpop.f32.mrf.mxu0
    %409 = vmatprep.mubr.bf16.mxu0 0
    %410 = vmatmul.mubr.bf16.gmra.mxu0 %v295
    %v411 = vpop.f32.mrf.mxu0
    %v412 = vadd.f32 0.0, %v411
    %v413 = vpop.f32.mrf.mxu0
    %v414 = vpop.f32.mrf.mxu0
    %v415 = vadd.f32 0.0, %v414
    %v416 = vpop.f32.mrf.mxu0
    %417 = vmatprep.mubr.bf16.mxu0 0
    %418 = vmatmul.mubr.bf16.gmra.mxu0 %v296
    %v419 = vpop.f32.mrf.mxu0
    %v420 = vadd.f32 0.0, %v419
    %v421 = vpop.f32.mrf.mxu0
    %v422 = vpop.f32.mrf.mxu0
    %v423 = vadd.f32 0.0, %v422
    %v424 = vpop.f32.mrf.mxu0
    %425 = vdwg.mxu0
    %v426 = vmax.f32 %v396, 0.0
    %v427 = vmax.f32 %v399, 0.0
    %v428 = vmax.f32 %v404, 0.0
    %v429 = vmax.f32 %v407, 0.0
    %v430 = vmax.f32 %v412, 0.0
    %v431 = vmax.f32 %v415, 0.0
    %v432 = vmax.f32 %v420, 0.0
    %v433 = vmax.f32 %v423, 0.0
    %v434 = vpack.c.bf16 %v427, %v426
    %v435 = vpack.c.bf16 %v429, %v428
    %v436 = vpack.c.bf16 %v431, %v430
    %v437 = vpack.c.bf16 %v433, %v432
    %v438 = vld [vmem:[#allocation2 + $0x80] sm:$0xf]
    %v439 = vld [vmem:[#allocation2 + $0x84] sm:$0xf]
    %v440 = vld [vmem:[#allocation2 + $0x88] sm:$0xf]
    %v441 = vld [vmem:[#allocation2 + $0x8c] sm:$0xf]
    %v442 = vld [vmem:[#allocation2 + $0x90] sm:$0xf]
    %v443 = vld [vmem:[#allocation2 + $0x94] sm:$0xf]
    %v444 = vld [vmem:[#allocation2 + $0x98] sm:$0xf]
    %v445 = vld [vmem:[#allocation2 + $0x9c] sm:$0xf]
    %v446 = vld [vmem:[#allocation2 + $0xa0] sm:$0xf]
    %v447 = vld [vmem:[#allocation2 + $0xa4] sm:$0xf]
    %v448 = vld [vmem:[#allocation2 + $0xa8] sm:$0xf]
    %v449 = vld [vmem:[#allocation2 + $0xac] sm:$0xf]
    %v450 = vld [vmem:[#allocation2 + $0xb0] sm:$0xf]
    %v451 = vld [vmem:[#allocation2 + $0xb4] sm:$0xf]
    %v452 = vld [vmem:[#allocation2 + $0xb8] sm:$0xf]
    %v453 = vld [vmem:[#allocation2 + $0xbc] sm:$0xf]
    %v470 = vunpack.c.l.b16 %v438
    %v471 = vunpack.c.l.b16 %v439
    %v472 = vunpack.c.l.b16 %v440
    %v473 = vunpack.c.l.b16 %v441
    %v474 = vunpack.c.l.b16 %v442
    %v475 = vunpack.c.l.b16 %v443
    %v476 = vunpack.c.l.b16 %v444
    %v477 = vunpack.c.l.b16 %v445
    %v478 = vunpack.c.l.b16 %v446
    %v479 = vunpack.c.l.b16 %v447
    %v480 = vunpack.c.l.b16 %v448
    %v481 = vunpack.c.l.b16 %v449
    %v482 = vunpack.c.l.b16 %v450
    %v483 = vunpack.c.l.b16 %v451
    %v484 = vunpack.c.l.b16 %v452
    %v485 = vunpack.c.l.b16 %v453
    %v486 = vpack.c.b16 %v471, %v470
    %v487 = vpack.c.b16 %v473, %v472
    %v488 = vpack.c.b16 %v475, %v474
    %v489 = vpack.c.b16 %v477, %v476
    %v490 = vpack.c.b16 %v479, %v478
    %v491 = vpack.c.b16 %v481, %v480
    %v492 = vpack.c.b16 %v483, %v482
    %v493 = vpack.c.b16 %v485, %v484
    %502 = vmatprep.subr.bf16.mxu0 0
    %503 = vmatpush1.bf16.msra.mxu0 %v493
    %504 = vmatprep.subr.bf16.mxu0 0
    %505 = vmatpush1.bf16.msra.mxu0 %v492
    %506 = vmatprep.subr.bf16.mxu0 0
    %507 = vmatpush1.bf16.msra.mxu0 %v491
    %508 = vmatprep.subr.bf16.mxu0 0
    %509 = vmatpush1.bf16.msra.mxu0 %v490
    %510 = vmatprep.subr.bf16.mxu0 0
    %511 = vmatpush1.bf16.msra.mxu0 %v489
    %512 = vmatprep.subr.bf16.mxu0 0
    %513 = vmatpush1.bf16.msra.mxu0 %v488
    %514 = vmatprep.subr.bf16.mxu0 0
    %515 = vmatpush1.bf16.msra.mxu0 %v487
    %516 = vmatprep.subr.bf16.mxu0 0
    %517 = vmatpush1.bf16.msra.mxu0 %v486
    %518 = vmatprep.subr.bf16.mxu0 0
    %519 = vmatpush2.bf16.msra.mxu0 0
    %520 = vmatprep.subr.bf16.mxu0 0
    %521 = vmatpush2.bf16.msra.mxu0 0
    %522 = vmatprep.subr.bf16.mxu0 0
    %523 = vmatpush2.bf16.msra.mxu0 0
    %524 = vmatprep.subr.bf16.mxu0 0
    %525 = vmatpush2.bf16.msra.mxu0 0
    %526 = vmatprep.subr.bf16.mxu0 0
    %527 = vmatpush2.bf16.msra.mxu0 0
    %528 = vmatprep.subr.bf16.mxu0 0
    %529 = vmatpush2.bf16.msra.mxu0 0
    %530 = vmatprep.subr.bf16.mxu0 0
    %531 = vmatpush2.bf16.msra.mxu0 0
    %532 = vmatprep.subr.bf16.mxu0 0
    %533 = vmatpush2.bf16.msra.mxu0 0
    %534 = vmatprep.mubr.bf16.mxu0 0
    %535 = vmatmul.mubr.bf16.gmra.mxu0 %v434
    %v536 = vpop.f32.mrf.mxu0
    %v537 = vadd.f32 0.0, %v536
    %v538 = vpop.f32.mrf.mxu0
    %v539 = vpop.f32.mrf.mxu0
    %v540 = vadd.f32 0.0, %v539
    %v541 = vpop.f32.mrf.mxu0
    %542 = vmatprep.mubr.bf16.mxu0 0
    %543 = vmatmul.mubr.bf16.gmra.mxu0 %v435
    %v544 = vpop.f32.mrf.mxu0
    %v545 = vadd.f32 0.0, %v544
    %v546 = vpop.f32.mrf.mxu0
    %v547 = vpop.f32.mrf.mxu0
    %v548 = vadd.f32 0.0, %v547
    %v549 = vpop.f32.mrf.mxu0
    %550 = vmatprep.mubr.bf16.mxu0 0
    %551 = vmatmul.mubr.bf16.gmra.mxu0 %v436
    %v552 = vpop.f32.mrf.mxu0
    %v553 = vadd.f32 0.0, %v552
    %v554 = vpop.f32.mrf.mxu0
    %v555 = vpop.f32.mrf.mxu0
    %v556 = vadd.f32 0.0, %v555
    %v557 = vpop.f32.mrf.mxu0
    %558 = vmatprep.mubr.bf16.mxu0 0
    %559 = vmatmul.mubr.bf16.gmra.mxu0 %v437
    %v560 = vpop.f32.mrf.mxu0
    %v561 = vadd.f32 0.0, %v560
    %v562 = vpop.f32.mrf.mxu0
    %v563 = vpop.f32.mrf.mxu0
    %v564 = vadd.f32 0.0, %v563
    %v565 = vpop.f32.mrf.mxu0
    %566 = vdwg.mxu0
    %v567 = vpack.c.bf16 %v540, %v537
    %v568 = vpack.c.bf16 %v548, %v545
    %v569 = vpack.c.bf16 %v556, %v553
    %v570 = vpack.c.bf16 %v564, %v561
    %v575 = vunpack.c.l.b16 %v567
    %v576 = vunpack.c.h.b16 %v567
    %v577 = vunpack.c.l.b16 %v568
    %v578 = vunpack.c.h.b16 %v568
    %v579 = vunpack.c.l.b16 %v569
    %v580 = vunpack.c.h.b16 %v569
    %v581 = vunpack.c.l.b16 %v570
    %v582 = vunpack.c.h.b16 %v570
    %v583 = vpack.c.b16 %v575, %v575
    %v584 = vpack.c.b16 %v576, %v576
    %v585 = vpack.c.b16 %v577, %v577
    %v586 = vpack.c.b16 %v578, %v578
    %v587 = vpack.c.b16 %v579, %v579
    %v588 = vpack.c.b16 %v580, %v580
    %v589 = vpack.c.b16 %v581, %v581
    %v590 = vpack.c.b16 %v582, %v582
    %599 = vst [vmem:[#allocation5] sm:$0xf] %v583
    %600 = vst [vmem:[#allocation5 + $0x4] sm:$0xf] %v584
    %601 = vst [vmem:[#allocation5 + $0x8] sm:$0xf] %v585
    %602 = vst [vmem:[#allocation5 + $0xc] sm:$0xf] %v586
    %603 = vst [vmem:[#allocation5 + $0x10] sm:$0xf] %v587
    %604 = vst [vmem:[#allocation5 + $0x14] sm:$0xf] %v588
    %605 = vst [vmem:[#allocation5 + $0x18] sm:$0xf] %v589
    %606 = vst [vmem:[#allocation5 + $0x1c] sm:$0xf] %v590
    // Predicated region
    $region18: #{tpu_custom_call.1} parent=1 // pred_check
      _
    $region19: #{tpu_custom_call.1} parent=1 // pred_check_branch
      %608 = sbr.rel (0) target = $region21
    $region20: #{tpu_custom_call.1} parent=1 // pred_region
      %s610 = ssub.s32 512, 512
      %611 = vsyncadd [#allocation4], %s610
      %s612 = sshll.u32 [#allocation5], 4
      %s613 = int_to_ptr.vmem [resolvable:$true] %s612
      %618 = dma.vmem_to_hbm [thread:$0]  %s613, 512, %s3, [#allocation4], 64, 64, 4
    $region21: #{tpu_custom_call.1} parent=1 // pred_fallthru
      _
    // Predicated region
    $region22: #{tpu_custom_call.1} parent=1 // pred_check
      _
    $region23: #{tpu_custom_call.1} parent=1 // pred_check_branch
      %620 = sbr.rel (0) target = $region25
    $region24: #{tpu_custom_call.1} parent=1 // pred_region
      %621 = dma.done [#allocation4], 512
    $region25: #{tpu_custom_call.1} parent=1 // pred_fallthru
      _
    %622 = vsyncpa [#allocation3], 1
    %623 = vsyncpa [#allocation4], 1

</llo_original>
